<compile_context>
chip_gen: v6e
topology: v6e:2x2x1
jax: 0.10.0
libtpu: 0.0.40
codegen_flags: <defaults>
</compile_context>

<pallas_src>
import functools

import jax
import jax.numpy as jnp
from jax import lax
from jax.experimental import pallas as pl
from jax.experimental.pallas import tpu as pltpu


# ----------------------------------------------------------------------------
# Kernel
# ----------------------------------------------------------------------------
def _sse_kernel(o_ref, l_ref, out_ref, acc_ref, *,
                tm, k, m_total, tiles_per_p, full_tiles, acc_rows):
    """Accumulate sum((o - l)^2) over this parallel-part's row-tile range."""
    j = pl.program_id(1)

    @pl.when(j == 0)
    def _():
        acc_ref[...] = jnp.zeros_like(acc_ref)

    # Global (unclamped) row-tile index.  The index maps use a clamped copy so
    # the DMA always lands inside the array; out-of-range / tail rows are
    # zeroed here instead of padding in HBM.
    t = pl.program_id(0) * tiles_per_p + j

    d = o_ref[...].astype(jnp.float32) - l_ref[...].astype(jnp.float32)
    sq = d * d

    def _accumulate(x):
        if acc_rows == 8:
            # (tm, K) -> (tm//8, 8, K) is layout-preserving (groups of 8
            # sublanes); the leading-axis sum is plain vreg adds on the VPU,
            # so there is no per-tile cross-sublane (XLU) reduce.
            acc_ref[...] += x.reshape(tm // 8, 8, k).sum(axis=0)
        else:
            acc_ref[...] += jnp.sum(x, axis=0, keepdims=True)

    # Interior tiles: unmasked, pure VALU mul+add.
    @pl.when(t < full_tiles)
    def _():
        _accumulate(sq)

    # Ragged tail / clamped-duplicate tiles only: mask rows past m_total.
    @pl.when(t >= full_tiles)
    def _():
        rows = t * tm + lax.broadcasted_iota(jnp.int32, (tm, 1), 0)
        _accumulate(jnp.where(rows < m_total, sq, 0.0))

    @pl.when(j == pl.num_programs(1) - 1)
    def _():
        # Single cross-sublane + cross-lane reduce per core, stored as a full
        # lane-dense (8, 128) block.
        out_ref[...] = jnp.broadcast_to(jnp.sum(acc_ref[...]), out_ref.shape)


# ----------------------------------------------------------------------------
# Hardware probing (trace-time; conservative fallbacks if unavailable)
# ----------------------------------------------------------------------------
def _vmem_capacity_bytes() -> int:
    try:
        return int(pltpu.get_tpu_info().vmem_capacity_bytes)
    except Exception:
        return 64 << 20  # conservative: assume v7x-class VMEM


def _num_tensorcores() -> int:
    """Parts for the leading 'parallel' grid axis (megacore / multi-TC)."""
    try:
        kind = jax.devices()[0].device_kind.lower()
    except Exception:
        return 1
    for tag in ("v7", "v5p", "v4"):
        if tag in kind:
            return 2
    return 1


# ----------------------------------------------------------------------------
# Wrapper
# ----------------------------------------------------------------------------
def _choose_layout(n_total, b, t, j, h, w, itemsize, block_bytes):
    """Pick a lane-dense (rows, lanes) flattening; reshape is free (row-major)."""
    for lanes in (512, 256, 128):
        if n_total % lanes == 0:
            return n_total // lanes, lanes
    # Fallback: spatial map on the lane axis -- unless even a minimal (8-row)
    # block would blow the per-block byte budget, in which case use lanes = W.
    k = h * w
    if 8 * k * itemsize > block_bytes:
        return b * t * j * h, w
    return b * t * j, k


def _sum_squared_error(o2: jax.Array, l2: jax.Array, *,
                       block_bytes: int, vmem_limit_bytes: int,
                       max_parts: int) -> jax.Array:
    """Pallas reduction: total sum((o2 - l2)^2) over an (M, K) slab."""
    M, K = o2.shape
    itemsize = jnp.dtype(o2.dtype).itemsize
    block_elems = max(1, block_bytes // itemsize)

    # Row-tile size: dtype-aware sublane multiple (f32:8, bf16:16, int8:32).
    sub = max(8, 32 // itemsize)
    tm = max(sub, (block_elems // K) // sub * sub)
    if tm >= M:
        tm = M  # single row tile; a full-extent block dim is always legal
    r_tiles = pl.cdiv(M, tm)
    full_tiles = M // tm  # tiles with every row in bounds (no mask needed)

    # Leading "parallel" axis: one part per TensorCore.
    num_parts = max_parts if r_tiles >= max_parts else 1
    tiles_per_p = pl.cdiv(r_tiles, num_parts)

    acc_rows = 8 if tm % 8 == 0 else 1

    def in_map(p, j):
        t = p * tiles_per_p + j
        return (jnp.minimum(t, r_tiles - 1), 0)

    kernel = functools.partial(
        _sse_kernel, tm=tm, k=K, m_total=M, tiles_per_p=tiles_per_p,
        full_tiles=full_tiles, acc_rows=acc_rows)

    n = M * K
    cost = pl.CostEstimate(
        flops=3 * n,
        transcendentals=0,
        bytes_accessed=n * (jnp.dtype(o2.dtype).itemsize
                            + jnp.dtype(l2.dtype).itemsize)
                       + num_parts * 8 * 128 * 4)

    partials = pl.pallas_call(
        kernel,
        out_shape=jax.ShapeDtypeStruct((num_parts, 8, 128), jnp.float32),
        grid_spec=pltpu.PrefetchScalarGridSpec(
            num_scalar_prefetch=0,
            grid=(num_parts, tiles_per_p),
            in_specs=[
                pl.BlockSpec((tm, K), in_map),
                pl.BlockSpec((tm, K), in_map),
            ],
            out_specs=pl.BlockSpec((1, 8, 128), lambda p, j: (p, 0, 0)),
            scratch_shapes=[pltpu.VMEM((acc_rows, K), jnp.float32)],
        ),
        compiler_params=pltpu.CompilerParams(
            dimension_semantics=("parallel", "arbitrary"),
            vmem_limit_bytes=vmem_limit_bytes,
        ),
        cost_estimate=cost,
    )(o2, l2)
    return jnp.sum(partials[:, 0, 0])


def mse_sequence_loss(output: jax.Array, labels: jax.Array) -> jax.Array:
    """Forward pass of MSESequenceLoss.

    output: (B, T, J, H, W)
    labels: (B, T, J, H, W) or (B, T-1, J, H, W) (frame 0 gets prepended)
    Returns a scalar float32 loss.
    """
    B, T, J, H, W = output.shape
    if labels.shape[1] != T:
        labels = jnp.concatenate([labels[:, :1], labels], axis=1)

    # Generation-conditional tiling budget.
    vmem_cap = _vmem_capacity_bytes()
    if vmem_cap >= (100 << 20):      # v5e / v6e class: 128 MiB physical VMEM
        vmem_limit = 96 << 20
        block_bytes = 16 << 20       # 2 inputs x 2 buffers = 64 MiB
    else:                            # v7x class: 64 MiB physical VMEM
        vmem_limit = 48 << 20
        block_bytes = 8 << 20        # 2 inputs x 2 buffers = 32 MiB

    itemsize = jnp.dtype(output.dtype).itemsize
    n_total = B * T * J * H * W
    M, K = _choose_layout(n_total, B, T, J, H, W, itemsize, block_bytes)
    o2 = output.reshape(M, K)   # native dtype; the kernel upcasts per tile
    l2 = labels.reshape(M, K)

    sse = _sum_squared_error(o2, l2, block_bytes=block_bytes,
                             vmem_limit_bytes=vmem_limit,
                             max_parts=_num_tensorcores())

    # sum over (stage, joint) of 0.5 * mean_{B,H,W}(diff^2):
    loss = 0.5 * sse / float(B * H * W)
    # module's final scaling: loss / num_joints * num_stages
    return loss / float(J) * float(T)


# ----------------------------------------------------------------------------
# Pure-JAX reference mirroring the PyTorch loop exactly
# ----------------------------------------------------------------------------
def _reference(output, labels):
    B, T, J, H, W = output.shape
    if labels.shape[1] != T:
        labels = jnp.concatenate([labels[:, :1], labels], axis=1)
    output = output.astype(jnp.float32)
    labels = labels.astype(jnp.float32)
    loss = 0.0
    for i_stage in range(T):
        for idx in range(J):
            p = output[:, i_stage, idx].reshape(B, -1)
            g = labels[:, i_stage, idx].reshape(B, -1)
            loss += 0.5 * jnp.mean((p - g) ** 2)
    return loss / J * T


if __name__ == "__main__":
    key = jax.random.PRNGKey(0)
    k1, k2 = jax.random.split(key)

    B, T, J, H, W = 2, 8, 4, 16, 16
    output = jax.random.normal(k1, (B, T, J, H, W), dtype=jnp.float32)
    # labels with T-1 frames to exercise the frame-0 prepend branch
    labels = jax.random.normal(k2, (B, T - 1, J, H, W), dtype=jnp.float32)

    loss = mse_sequence_loss(output, labels)
    loss = jax.block_until_ready(loss)

    ref = _reference(output, labels)
    assert jnp.allclose(loss, ref, rtol=1e-5, atol=1e-5), (loss, ref)

    print("KERNEL_OK")
</pallas_src>

<mosaic_0001>
module attributes {stable_mosaic.version = 11 : i64} {
  func.func @_sse_kernel(%arg0: i32, %arg1: i32, %arg2: memref<32x512xf32, #tpu.memory_space<vmem>>, %arg3: memref<32x512xf32, #tpu.memory_space<vmem>>, %arg4: memref<1x8x128xf32, #tpu.memory_space<vmem>>, %arg5: memref<8x512xf32, #tpu.memory_space<vmem>>) attributes {dimension_semantics = [#tpu.dimension_semantics<parallel>, #tpu.dimension_semantics<arbitrary>], iteration_bounds = array<i64: 1, 1>, scalar_prefetch = 0 : i64, scratch_operands = 1 : i64, tpu.core_type = #tpu.core_type<tc>, window_params = [{transform_indices = @transform_0, window_bounds = array<i64: 32, 512>}, {transform_indices = @transform_1, window_bounds = array<i64: 32, 512>}, {transform_indices = @transform_2, window_bounds = array<i64: 1, 8, 128>}]} {
    %c0_i32 = arith.constant 0 : i32
    %0 = arith.cmpi eq, %arg1, %c0_i32 : i32
    %1 = arith.extui %0 : i1 to i32
    %c0_i32_0 = arith.constant 0 : i32
    %2 = arith.cmpi ne, %1, %c0_i32_0 : i32
    scf.if %2 {
      %cst = arith.constant 0.000000e+00 : f32
      %18 = vector.broadcast %cst : f32 to vector<8x512xf32>
      %c0_10 = arith.constant 0 : index
      %c0_11 = arith.constant 0 : index
      %19 = vector.load %arg5[%c0_10, %c0_11] : memref<8x512xf32, #tpu.memory_space<vmem>>, vector<8x512xf32>
      tpu.vector_store %arg5[%c0_10, %c0_11], %18 {strides = array<i32>} : memref<8x512xf32, #tpu.memory_space<vmem>>, vector<8x512xf32>,
    } else {
    }
    %c1_i32 = arith.constant 1 : i32
    %3 = arith.muli %arg0, %c1_i32 : i32
    %4 = arith.addi %3, %arg1 : i32
    %c0 = arith.constant 0 : index
    %c0_1 = arith.constant 0 : index
    %5 = vector.load %arg2[%c0, %c0_1] : memref<32x512xf32, #tpu.memory_space<vmem>>, vector<32x512xf32>
    %c0_2 = arith.constant 0 : index
    %c0_3 = arith.constant 0 : index
    %6 = vector.load %arg3[%c0_2, %c0_3] : memref<32x512xf32, #tpu.memory_space<vmem>>, vector<32x512xf32>
    %7 = arith.subf %5, %6 : vector<32x512xf32>
    %8 = arith.mulf %7, %7 : vector<32x512xf32>
    %c1_i32_4 = arith.constant 1 : i32
    %9 = arith.cmpi slt, %4, %c1_i32_4 : i32
    %10 = arith.extui %9 : i1 to i32
    %c0_i32_5 = arith.constant 0 : i32
    %11 = arith.cmpi ne, %10, %c0_i32_5 : i32
    scf.if %11 {
      %c0_10 = arith.constant 0 : index
      %c0_11 = arith.constant 0 : index
      %18 = vector.load %arg5[%c0_10, %c0_11] : memref<8x512xf32, #tpu.memory_space<vmem>>, vector<8x512xf32>
      %19 = vector.shape_cast %8 : vector<32x512xf32> to vector<4x8x512xf32>
      %cst = arith.constant dense<0.000000e+00> : vector<8x512xf32>
      %20 = vector.multi_reduction <add>, %19, %cst [0] : vector<4x8x512xf32> to vector<8x512xf32>
      %21 = arith.addf %18, %20 : vector<8x512xf32>
      %c0_12 = arith.constant 0 : index
      %c0_13 = arith.constant 0 : index
      %22 = vector.load %arg5[%c0_12, %c0_13] : memref<8x512xf32, #tpu.memory_space<vmem>>, vector<8x512xf32>
      tpu.vector_store %arg5[%c0_12, %c0_13], %21 {strides = array<i32>} : memref<8x512xf32, #tpu.memory_space<vmem>>, vector<8x512xf32>,
    } else {
    }
    %c1_i32_6 = arith.constant 1 : i32
    %12 = arith.cmpi sge, %4, %c1_i32_6 : i32
    %13 = arith.extui %12 : i1 to i32
    %c0_i32_7 = arith.constant 0 : i32
    %14 = arith.cmpi ne, %13, %c0_i32_7 : i32
    scf.if %14 {
      %c32_i32 = arith.constant 32 : i32
      %18 = arith.muli %4, %c32_i32 : i32
      %19 = tpu.iota {dimensions = array<i32: 0>} : vector<32x1xi32>
      %20 = vector.broadcast %18 : i32 to vector<32x1xi32>
      %21 = arith.addi %20, %19 : vector<32x1xi32>
      %c32_i32_10 = arith.constant 32 : i32
      %22 = vector.broadcast %c32_i32_10 : i32 to vector<32x1xi32>
      %23 = arith.cmpi slt, %21, %22 : vector<32x1xi32>
      %cst = arith.constant 0.000000e+00 : f32
      %24 = vector.shape_cast %23 : vector<32x1xi1> to vector<32x1xi1>
      %25 = vector.broadcast %24 : vector<32x1xi1> to vector<32x512xi1>
      %26 = vector.broadcast %cst : f32 to vector<32x512xf32>
      %27 = arith.select %25, %8, %26 : vector<32x512xi1>, vector<32x512xf32>
      %c0_11 = arith.constant 0 : index
      %c0_12 = arith.constant 0 : index
      %28 = vector.load %arg5[%c0_11, %c0_12] : memref<8x512xf32, #tpu.memory_space<vmem>>, vector<8x512xf32>
      %29 = vector.shape_cast %27 : vector<32x512xf32> to vector<4x8x512xf32>
      %cst_13 = arith.constant dense<0.000000e+00> : vector<8x512xf32>
      %30 = vector.multi_reduction <add>, %29, %cst_13 [0] : vector<4x8x512xf32> to vector<8x512xf32>
      %31 = arith.addf %28, %30 : vector<8x512xf32>
      %c0_14 = arith.constant 0 : index
      %c0_15 = arith.constant 0 : index
      %32 = vector.load %arg5[%c0_14, %c0_15] : memref<8x512xf32, #tpu.memory_space<vmem>>, vector<8x512xf32>
      tpu.vector_store %arg5[%c0_14, %c0_15], %31 {strides = array<i32>} : memref<8x512xf32, #tpu.memory_space<vmem>>, vector<8x512xf32>,
    } else {
    }
    %c0_i32_8 = arith.constant 0 : i32
    %15 = arith.cmpi eq, %arg1, %c0_i32_8 : i32
    %16 = arith.extui %15 : i1 to i32
    %c0_i32_9 = arith.constant 0 : i32
    %17 = arith.cmpi ne, %16, %c0_i32_9 : i32
    scf.if %17 {
      %c0_10 = arith.constant 0 : index
      %c0_11 = arith.constant 0 : index
      %18 = vector.load %arg5[%c0_10, %c0_11] : memref<8x512xf32, #tpu.memory_space<vmem>>, vector<8x512xf32>
      %19 = vector.shape_cast %18 : vector<8x512xf32> to vector<1x8x512xf32>
      %cst = arith.constant dense<0.000000e+00> : vector<1xf32>
      %20 = vector.multi_reduction <add>, %19, %cst [1, 2] : vector<1x8x512xf32> to vector<1xf32>
      %21 = vector.shape_cast %20 : vector<1xf32> to vector<1x1x1xf32>
      %22 = vector.extract %21[0, 0, 0] : f32 from vector<1x1x1xf32>
      %23 = vector.broadcast %22 : f32 to vector<1x8x128xf32>
      %c0_12 = arith.constant 0 : index
      %c0_13 = arith.constant 0 : index
      %c0_14 = arith.constant 0 : index
      %24 = vector.load %arg4[%c0_12, %c0_13, %c0_14] : memref<1x8x128xf32, #tpu.memory_space<vmem>>, vector<1x8x128xf32>
      tpu.vector_store %arg4[%c0_12, %c0_13, %c0_14], %23 {strides = array<i32>} : memref<1x8x128xf32, #tpu.memory_space<vmem>>, vector<1x8x128xf32>,
    } else {
    }
    return
  }
  func.func @transform_0(%arg0: i32, %arg1: i32) -> (i32, i32) {
    %c1_i32 = arith.constant 1 : i32
    %0 = arith.muli %arg0, %c1_i32 : i32
    %1 = arith.addi %0, %arg1 : i32
    %c0_i32 = arith.constant 0 : i32
    %2 = arith.minsi %1, %c0_i32 : i32
    %c0_i32_0 = arith.constant 0 : i32
    %c0_i32_1 = arith.constant 0 : i32
    return %2, %c0_i32_0 : i32, i32
  }
  func.func @transform_1(%arg0: i32, %arg1: i32) -> (i32, i32) {
    %c1_i32 = arith.constant 1 : i32
    %0 = arith.muli %arg0, %c1_i32 : i32
    %1 = arith.addi %0, %arg1 : i32
    %c0_i32 = arith.constant 0 : i32
    %2 = arith.minsi %1, %c0_i32 : i32
    %c0_i32_0 = arith.constant 0 : i32
    %c0_i32_1 = arith.constant 0 : i32
    return %2, %c0_i32_0 : i32, i32
  }
  func.func @transform_2(%arg0: i32, %arg1: i32) -> (i32, i32, i32) {
    %c0_i32 = arith.constant 0 : i32
    %c0_i32_0 = arith.constant 0 : i32
    %c0_i32_1 = arith.constant 0 : i32
    return %arg0, %c0_i32, %c0_i32_0 : i32, i32, i32
  }
}

</mosaic_0001>

<llo_original>
// kernel: tpu_custom_call.1
$region0: #{tpu_custom_call.1}
  #allocation0 [shape = 'u32[]', space=smem, size = 0x4, offset = 0x4, fixed_abs, tag = 'smem constant byte address 0x4 - core index']
  #allocation1 [shape = 'u32[144,128]{1,0:T(1,128)}', space=vmem, size = 0x12000, scoped, tag = 'internal scratch']
  #allocation2 [shape = 'f32[8,512]{1,0:T(8,128)}', space=vmem, size = 0x4000, scoped, tag = 'scratch operand']
  %s0 = inlined_call_operand.hbm [shape: f32[32,512], index: 0, kind: input, shape index: {}]
  %s1 = inlined_call_operand.hbm [shape: f32[32,512], index: 1, kind: input, shape index: {}]
  %s2 = inlined_call_operand.hbm [shape: f32[1,8,128], index: 2, kind: output, shape index: {}]
  %s3 = sld [smem:[#allocation0]]
  $region42: #{tpu_custom_call.1} parent=0
    _
  %s5 = ssub.s32 1, %s3
  %s6 = scalar_select 0, %s5, %s3
  $region1: #{tpu_custom_call.1} parent=0
    #allocation3 [shape = 'u8[65536]{0}', space=vmem, size = 0x10000, scoped, tag = 'input window, operand 0, single buffered']
    #allocation4 [shape = 's32[1]{0}', space=sflag, size = 0x4, scoped, tag = 'scoped memory for tpu_custom_call.1']
    #allocation5 [shape = 's32[1]{0}', space=sflag, size = 0x4, scoped, tag = 'scoped memory for tpu_custom_call.1']
    #allocation6 [shape = 'u8[65536]{0}', space=vmem, size = 0x10000, scoped, tag = 'input window, operand 1, single buffered']
    #allocation7 [shape = 's32[1]{0}', space=sflag, size = 0x4, scoped, tag = 'scoped memory for tpu_custom_call.1']
    #allocation8 [shape = 'u8[4096]{0}', space=vmem, size = 0x1000, scoped, tag = 'output window, operand 0, single buffered']
    %7 = vsyncpa [#allocation4], 0
    %8 = vsyncpa [#allocation7], 0
    %9 = vsyncpa [#allocation5], 0
    // Predicated region
    $region2: #{tpu_custom_call.1} parent=1 // pred_check
      _
    $region3: #{tpu_custom_call.1} parent=1 // pred_check_branch
      %11 = sbr.rel (0) target = $region5
    $region4: #{tpu_custom_call.1} parent=1 // pred_region
      %s12 = sadd.s32 0, 0
      %p13 = scmp.lt.s32.totalorder %s12, 0
      %s14 = scalar_select %p13, %s12, 0
      %s15 = smul.u32 4, %s14
      %s17 = ssub.s32 2048, 2048
      %18 = vsyncadd [#allocation4], %s17
      %s19 = smul.addr %s15, 4
      %s20 = smul.addr %s19, 128
      %s21 = scalar_lea.hbm %s0, %s20
      %s22 = sshll.u32 [#allocation3], 4
      %s23 = int_to_ptr.vmem [resolvable:$true] %s22
      %28 = dma.hbm_to_vmem [thread:$0]  %s21, 2048, %s23, [#allocation4], 512, 512, 32
    $region5: #{tpu_custom_call.1} parent=1 // pred_fallthru
      _
    // Predicated region
    $region6: #{tpu_custom_call.1} parent=1 // pred_check
      _
    $region7: #{tpu_custom_call.1} parent=1 // pred_check_branch
      %30 = sbr.rel (0) target = $region9
    $region8: #{tpu_custom_call.1} parent=1 // pred_region
      %s31 = sadd.s32 0, 0
      %p32 = scmp.lt.s32.totalorder %s31, 0
      %s33 = scalar_select %p32, %s31, 0
      %s34 = smul.u32 4, %s33
      %s36 = ssub.s32 2048, 2048
      %37 = vsyncadd [#allocation7], %s36
      %s38 = smul.addr %s34, 4
      %s39 = smul.addr %s38, 128
      %s40 = scalar_lea.hbm %s1, %s39
      %s41 = sshll.u32 [#allocation6], 4
      %s42 = int_to_ptr.vmem [resolvable:$true] %s41
      %47 = dma.hbm_to_vmem [thread:$0]  %s40, 2048, %s42, [#allocation7], 512, 512, 32
    $region9: #{tpu_custom_call.1} parent=1 // pred_fallthru
      _
    // Predicated region
    $region10: #{tpu_custom_call.1} parent=1 // pred_check
      _
    $region11: #{tpu_custom_call.1} parent=1 // pred_check_branch
      %49 = sbr.rel (0) target = $region13
    $region12: #{tpu_custom_call.1} parent=1 // pred_region
      %50 = dma.done [#allocation4], 2048
    $region13: #{tpu_custom_call.1} parent=1 // pred_fallthru
      _
    // Predicated region
    $region14: #{tpu_custom_call.1} parent=1 // pred_check
      _
    $region15: #{tpu_custom_call.1} parent=1 // pred_check_branch
      %52 = sbr.rel (0) target = $region17
    $region16: #{tpu_custom_call.1} parent=1 // pred_region
      %53 = dma.done [#allocation7], 2048
    $region17: #{tpu_custom_call.1} parent=1 // pred_fallthru
      _
    %s54 = sadd.s32 0, 0
    %p55 = scmp.lt.s32.totalorder %s54, 0
    %s56 = scalar_select %p55, %s54, 0
    %s57 = smul.u32 4, %s56
    %s58 = sadd.s32 0, 0
    %p59 = scmp.lt.s32.totalorder %s58, 0
    %s60 = scalar_select %p59, %s58, 0
    %s61 = smul.u32 4, %s60
    %p62 = scmp.eq.s32.totalorder 0, 0
    // Predicated region
    $region18: #{tpu_custom_call.1} parent=1 // pred_check
      %p63 = pneg %p62
    $region19: #{tpu_custom_call.1} parent=1 // pred_check_branch
      %65 = sbr.rel (%p63) target = $region21
    $region20: #{tpu_custom_call.1} parent=1 // pred_region
      %66 = vst [vmem:[#allocation2] sm:$0xff] 0.0
      %67 = vst [vmem:[#allocation2 + $0x8] sm:$0xff] 0.0
      %68 = vst [vmem:[#allocation2 + $0x10] sm:$0xff] 0.0
      %69 = vst [vmem:[#allocation2 + $0x18] sm:$0xff] 0.0
    $region21: #{tpu_custom_call.1} parent=1 // pred_fallthru
      _
    %s70 = sadd.s32 0, 0
    %v71 = vld [vmem:[#allocation3] sm:$0xff]
    %v72 = vld [vmem:[#allocation3 + $0x8] sm:$0xff]
    %v73 = vld [vmem:[#allocation3 + $0x10] sm:$0xff]
    %v74 = vld [vmem:[#allocation3 + $0x18] sm:$0xff]
    %v75 = vld [vmem:[#allocation3 + $0x20] sm:$0xff]
    %v76 = vld [vmem:[#allocation3 + $0x28] sm:$0xff]
    %v77 = vld [vmem:[#allocation3 + $0x30] sm:$0xff]
    %v78 = vld [vmem:[#allocation3 + $0x38] sm:$0xff]
    %v79 = vld [vmem:[#allocation3 + $0x40] sm:$0xff]
    %v80 = vld [vmem:[#allocation3 + $0x48] sm:$0xff]
    %v81 = vld [vmem:[#allocation3 + $0x50] sm:$0xff]
    %v82 = vld [vmem:[#allocation3 + $0x58] sm:$0xff]
    %v83 = vld [vmem:[#allocation3 + $0x60] sm:$0xff]
    %v84 = vld [vmem:[#allocation3 + $0x68] sm:$0xff]
    %v85 = vld [vmem:[#allocation3 + $0x70] sm:$0xff]
    %v86 = vld [vmem:[#allocation3 + $0x78] sm:$0xff]
    %v87 = vld [vmem:[#allocation6] sm:$0xff]
    %v88 = vld [vmem:[#allocation6 + $0x8] sm:$0xff]
    %v89 = vld [vmem:[#allocation6 + $0x10] sm:$0xff]
    %v90 = vld [vmem:[#allocation6 + $0x18] sm:$0xff]
    %v91 = vld [vmem:[#allocation6 + $0x20] sm:$0xff]
    %v92 = vld [vmem:[#allocation6 + $0x28] sm:$0xff]
    %v93 = vld [vmem:[#allocation6 + $0x30] sm:$0xff]
    %v94 = vld [vmem:[#allocation6 + $0x38] sm:$0xff]
    %v95 = vld [vmem:[#allocation6 + $0x40] sm:$0xff]
    %v96 = vld [vmem:[#allocation6 + $0x48] sm:$0xff]
    %v97 = vld [vmem:[#allocation6 + $0x50] sm:$0xff]
    %v98 = vld [vmem:[#allocation6 + $0x58] sm:$0xff]
    %v99 = vld [vmem:[#allocation6 + $0x60] sm:$0xff]
    %v100 = vld [vmem:[#allocation6 + $0x68] sm:$0xff]
    %v101 = vld [vmem:[#allocation6 + $0x70] sm:$0xff]
    %v102 = vld [vmem:[#allocation6 + $0x78] sm:$0xff]
    %v103 = vsub.f32 %v71, %v87
    %v104 = vsub.f32 %v72, %v88
    %v105 = vsub.f32 %v73, %v89
    %v106 = vsub.f32 %v74, %v90
    %v107 = vsub.f32 %v75, %v91
    %v108 = vsub.f32 %v76, %v92
    %v109 = vsub.f32 %v77, %v93
    %v110 = vsub.f32 %v78, %v94
    %v111 = vsub.f32 %v79, %v95
    %v112 = vsub.f32 %v80, %v96
    %v113 = vsub.f32 %v81, %v97
    %v114 = vsub.f32 %v82, %v98
    %v115 = vsub.f32 %v83, %v99
    %v116 = vsub.f32 %v84, %v100
    %v117 = vsub.f32 %v85, %v101
    %v118 = vsub.f32 %v86, %v102
    %v119 = vmul.f32 %v103, %v103
    %v120 = vmul.f32 %v104, %v104
    %v121 = vmul.f32 %v105, %v105
    %v122 = vmul.f32 %v106, %v106
    %v123 = vmul.f32 %v107, %v107
    %v124 = vmul.f32 %v108, %v108
    %v125 = vmul.f32 %v109, %v109
    %v126 = vmul.f32 %v110, %v110
    %v127 = vmul.f32 %v111, %v111
    %v128 = vmul.f32 %v112, %v112
    %v129 = vmul.f32 %v113, %v113
    %v130 = vmul.f32 %v114, %v114
    %v131 = vmul.f32 %v115, %v115
    %v132 = vmul.f32 %v116, %v116
    %v133 = vmul.f32 %v117, %v117
    %v134 = vmul.f32 %v118, %v118
    %p135 = scmp.lt.s32.totalorder %s70, 1
    // Predicated region
    $region22: #{tpu_custom_call.1} parent=1 // pred_check
      %p136 = pneg %p135
    $region23: #{tpu_custom_call.1} parent=1 // pred_check_branch
      %138 = sbr.rel (%p136) target = $region25
    $region24: #{tpu_custom_call.1} parent=1 // pred_region
      %v139 = vld [vmem:[#allocation2] sm:$0xff]
      %v140 = vld [vmem:[#allocation2 + $0x8] sm:$0xff]
      %v141 = vld [vmem:[#allocation2 + $0x10] sm:$0xff]
      %v142 = vld [vmem:[#allocation2 + $0x18] sm:$0xff]
      %v143 = vadd.f32 %v119, %v123
      %v144 = vadd.f32 %v143, %v127
      %v145 = vadd.f32 %v144, %v131
      %v146 = vadd.f32 %v120, %v124
      %v147 = vadd.f32 %v146, %v128
      %v148 = vadd.f32 %v147, %v132
      %v149 = vadd.f32 %v121, %v125
      %v150 = vadd.f32 %v149, %v129
      %v151 = vadd.f32 %v150, %v133
      %v152 = vadd.f32 %v122, %v126
      %v153 = vadd.f32 %v152, %v130
      %v154 = vadd.f32 %v153, %v134
      %v155 = vadd.f32 %v139, %v145
      %v156 = vadd.f32 %v140, %v148
      %v157 = vadd.f32 %v141, %v151
      %v158 = vadd.f32 %v142, %v154
      %159 = vst [vmem:[#allocation2] sm:$0xff] %v155
      %160 = vst [vmem:[#allocation2 + $0x8] sm:$0xff] %v156
      %161 = vst [vmem:[#allocation2 + $0x10] sm:$0xff] %v157
      %162 = vst [vmem:[#allocation2 + $0x18] sm:$0xff] %v158
    $region25: #{tpu_custom_call.1} parent=1 // pred_fallthru
      _
    %p163 = scmp.ge.s32.totalorder %s70, 1
    // Predicated region
    $region26: #{tpu_custom_call.1} parent=1 // pred_check
      %p164 = pneg %p163
    $region27: #{tpu_custom_call.1} parent=1 // pred_check_branch
      %166 = sbr.rel (%p164) target = $region29
    $region28: #{tpu_custom_call.1} parent=1 // pred_region
      %s167 = smul.u32 %s70, 32
      %v168 = vlaneseq
      %v169 = vshrl.u32 %v168, 7
      %v170 = vadd.s32 %v169, 8
      %v171 = vadd.s32 %v169, 16
      %v172 = vadd.s32 %v169, 24
      %v173 = vstv %s167
      %v174 = vadd.s32 %v173, %v169
      %v175 = vadd.s32 %v173, %v170
      %v176 = vadd.s32 %v173, %v171
      %v177 = vadd.s32 %v173, %v172
      %vm178 = vcmp.lt.s32.totalorder %v174, 32
      %vm179 = vcmp.lt.s32.totalorder %v175, 32
      %vm180 = vcmp.lt.s32.totalorder %v176, 32
      %vm181 = vcmp.lt.s32.totalorder %v177, 32
      %v182 = vsel %vm178, 1, 0
      %v183 = vsel %vm179, 1, 0
      %v184 = vsel %vm180, 1, 0
      %v185 = vsel %vm181, 1, 0
      %vm186 = vcmp.eq.s32.totalorder %v182, 1
      %vm187 = vcmp.eq.s32.totalorder %v183, 1
      %vm188 = vcmp.eq.s32.totalorder %v184, 1
      %vm189 = vcmp.eq.s32.totalorder %v185, 1
      %v190 = vsel %vm186, %v119, 0.0
      %v191 = vsel %vm186, %v120, 0.0
      %v192 = vsel %vm186, %v121, 0.0
      %v193 = vsel %vm186, %v122, 0.0
      %v194 = vsel %vm187, %v123, 0.0
      %v195 = vsel %vm187, %v124, 0.0
      %v196 = vsel %vm187, %v125, 0.0
      %v197 = vsel %vm187, %v126, 0.0
      %v198 = vsel %vm188, %v127, 0.0
      %v199 = vsel %vm188, %v128, 0.0
      %v200 = vsel %vm188, %v129, 0.0
      %v201 = vsel %vm188, %v130, 0.0
      %v202 = vsel %vm189, %v131, 0.0
      %v203 = vsel %vm189, %v132, 0.0
      %v204 = vsel %vm189, %v133, 0.0
      %v205 = vsel %vm189, %v134, 0.0
      %v206 = vld [vmem:[#allocation2] sm:$0xff]
      %v207 = vld [vmem:[#allocation2 + $0x8] sm:$0xff]
      %v208 = vld [vmem:[#allocation2 + $0x10] sm:$0xff]
      %v209 = vld [vmem:[#allocation2 + $0x18] sm:$0xff]
      %v210 = vadd.f32 %v190, %v194
      %v211 = vadd.f32 %v210, %v198
      %v212 = vadd.f32 %v211, %v202
      %v213 = vadd.f32 %v191, %v195
      %v214 = vadd.f32 %v213, %v199
      %v215 = vadd.f32 %v214, %v203
      %v216 = vadd.f32 %v192, %v196
      %v217 = vadd.f32 %v216, %v200
      %v218 = vadd.f32 %v217, %v204
      %v219 = vadd.f32 %v193, %v197
      %v220 = vadd.f32 %v219, %v201
      %v221 = vadd.f32 %v220, %v205
      %v222 = vadd.f32 %v206, %v212
      %v223 = vadd.f32 %v207, %v215
      %v224 = vadd.f32 %v208, %v218
      %v225 = vadd.f32 %v209, %v221
      %226 = vst [vmem:[#allocation2] sm:$0xff] %v222
      %227 = vst [vmem:[#allocation2 + $0x8] sm:$0xff] %v223
      %228 = vst [vmem:[#allocation2 + $0x10] sm:$0xff] %v224
      %229 = vst [vmem:[#allocation2 + $0x18] sm:$0xff] %v225
    $region29: #{tpu_custom_call.1} parent=1 // pred_fallthru
      _
    // Predicated region
    $region30: #{tpu_custom_call.1} parent=1 // pred_check
      %p230 = pneg %p62
    $region31: #{tpu_custom_call.1} parent=1 // pred_check_branch
      %232 = sbr.rel (%p230) target = $region33
    $region32: #{tpu_custom_call.1} parent=1 // pred_region
      %v233 = vld [vmem:[#allocation2] sm:$0xff]
      %v234 = vld [vmem:[#allocation2 + $0x8] sm:$0xff]
      %v235 = vld [vmem:[#allocation2 + $0x10] sm:$0xff]
      %v236 = vld [vmem:[#allocation2 + $0x18] sm:$0xff]
      %v237 = vadd.f32 %v233, %v234
      %v238 = vadd.f32 %v237, %v235
      %v239 = vadd.f32 %v238, %v236
      %240 = vadd.xlane.f32.xlu0 %v239
      %v241 = vpop.xlane.xlu0 %240
      %v242 = vrot.slane %v241, 4
      %v243 = vadd.f32 %v241, %v242
      %v244 = vrot.slane %v243, 2
      %v245 = vadd.f32 %v243, %v244
      %v246 = vrot.slane %v245, 1
      %v247 = vadd.f32 %v245, %v246
      %s248 = vtos %v247
      %v249 = vstv %s248
      %250 = vst [vmem:[#allocation8] sm:$0xff] %v249
    $region33: #{tpu_custom_call.1} parent=1 // pred_fallthru
      _
    // Predicated region
    $region34: #{tpu_custom_call.1} parent=1 // pred_check
      _
    $region35: #{tpu_custom_call.1} parent=1 // pred_check_branch
      %252 = sbr.rel (0) target = $region37
    $region36: #{tpu_custom_call.1} parent=1 // pred_region
      %s254 = ssub.s32 128, 128
      %255 = vsyncadd [#allocation5], %s254
      %s257 = sshll.u32 [#allocation8], 4
      %s258 = int_to_ptr.vmem [resolvable:$true] %s257
      %260 = dma.vmem_to_hbm [thread:$0]  %s258, 128, %s2, [#allocation5]
    $region37: #{tpu_custom_call.1} parent=1 // pred_fallthru
      _
    // Predicated region
    $region38: #{tpu_custom_call.1} parent=1 // pred_check
      _
    $region39: #{tpu_custom_call.1} parent=1 // pred_check_branch
      %262 = sbr.rel (0) target = $region41
    $region40: #{tpu_custom_call.1} parent=1 // pred_region
      %263 = dma.done [#allocation5], 128
    $region41: #{tpu_custom_call.1} parent=1 // pred_fallthru
      _
    %264 = vsyncpa [#allocation4], 1
    %265 = vsyncpa [#allocation7], 1
    %266 = vsyncpa [#allocation5], 1

</llo_original>
